<compile_context>
chip_gen: v7x
topology: tpu7x:2x2x1
jax: 0.10.0
libtpu: 0.0.40
codegen_flags: <defaults>
</compile_context>

<pallas_src>
import functools

import jax
import jax.numpy as jnp
from jax.experimental import pallas as pl
from jax.experimental.pallas import tpu as pltpu

_MIB = 1024 * 1024


# ----------------------------------------------------------------------------
# Hardware-aware sizing helpers
# ----------------------------------------------------------------------------
def _device_kind():
    try:
        return jax.devices()[0].device_kind.lower()
    except Exception:  # pragma: no cover - CPU fallback / odd runtimes
        return ""


def _vmem_capacity_bytes(kind):
    """Physical per-core VMEM capacity (bytes)."""
    try:
        cap = int(getattr(pltpu.get_tpu_info(), "vmem_capacity_bytes", 0) or 0)
        if cap > 0:
            return cap
    except Exception:
        pass
    if "v7" in kind or "7x" in kind:
        return 64 * _MIB          # v7x: 64 MiB per TensorCore
    return 128 * _MIB             # v5e / v6e (and older): 128 MiB


def _num_tensorcores(kind):
    """TensorCores addressable via a 'parallel' grid axis on one device."""
    k = kind.replace(" ", "")
    if "v7" in k or "7x" in k:
        return 2                  # v7x: 2 TCs per chip
    if ("v4" in k or "v5p" in k or ("v5" in k and "lite" not in k and "v5e" not in k)) \
            and "lite" not in k:
        return 2                  # v4 / v5p megacore
    return 1                      # v5e / v6e: single TensorCore


def _sublane_padded_rows(rows, dtype):
    """Rows rounded up to the dtype sublane tile (8 f32 / 16 bf16 / 32 int8)."""
    sub = max(8, 32 // jnp.dtype(dtype).itemsize)
    return ((rows + sub - 1) // sub) * sub


# ----------------------------------------------------------------------------
# Tiling helpers
# ----------------------------------------------------------------------------
def _pick_row_pack(num, f):
    """Split each sample's F features into G rows so N*G fills sublanes."""
    if num >= 8:
        return 1
    for cand in (8, 4, 2):               # prefer keeping rows >= 128 lanes wide
        if f % cand == 0 and f // cand >= 128:
            return cand
    for cand in (8, 4, 2):
        if f % cand == 0:
            return cand
    return 1


def _pick_tile_f(per_lane_bytes, f_per_row, input_budget, num_splits_hint):
    """Largest power-of-two multiple of 128 lanes fitting the VMEM input budget,
    then shrunk (>=128) so each parallel split gets >= ~4 reduction steps."""
    if f_per_row <= 128:
        return f_per_row                  # full lane extent, single exact tile
    tile_f = 128
    while tile_f * 2 <= f_per_row and per_lane_bytes * (tile_f * 2) <= input_budget:
        tile_f *= 2
    min_tiles = 4 * num_splits_hint       # hide pipeline fill/drain
    while tile_f > 128 and pl.cdiv(f_per_row, tile_f) < min_tiles:
        tile_f //= 2
    return tile_f


def _validate_tile_f(tile_f, f_per_row):
    if f_per_row <= 128:
        ok = tile_f == f_per_row
    else:
        m = tile_f // 128
        ok = (tile_f % 128 == 0) and (m & (m - 1)) == 0 and 128 <= tile_f <= f_per_row
    if not ok:
        raise ValueError(
            f"tile_f={tile_f} is invalid for f_per_row={f_per_row}: it must equal "
            f"f_per_row when f_per_row<=128, otherwise be a power-of-two multiple "
            f"of 128 lanes that is <= f_per_row.")


def _lane_fold(x, target_lanes):
    """Reduce the lane axis down to `target_lanes` using only lane-aligned
    VPU adds (slices at multiples of 128 lanes => no relayout, no XLU)."""
    w = x.shape[-1]
    while w > target_lanes:
        w //= 2
        x = x[:, :w] + x[:, w:]
    return x


# ----------------------------------------------------------------------------
# Kernel
# ----------------------------------------------------------------------------
def _dice_kernel(r_ref, l_ref, inter_ref, denom_ref, *,
                 f_per_row, tile_f, total_tiles, tiles_per_split, num_splits):
    p = pl.program_id(0)                       # parallel (TensorCore) split
    k = pl.program_id(1)                       # reduction tile ("arbitrary")
    gi = p * tiles_per_split + k               # global reduction-tile index

    # Output blocks are resident across the reduction axis (block index depends
    # only on p), so they double as accumulators: zero them at k == 0.
    @pl.when(k == 0)
    def _():
        inter_ref[...] = jnp.zeros_like(inter_ref)
        denom_ref[...] = jnp.zeros_like(denom_ref)

    target = inter_ref.shape[-1]

    def accumulate(mask_tail):
        r = jax.nn.sigmoid(r_ref[...].astype(jnp.float32))
        l = l_ref[...].astype(jnp.float32)
        if mask_tail:
            # The ragged last tile reads past the end of the row; whatever
            # garbage (even NaN/Inf after sigmoid) lands there is discarded by
            # the select below.  Do NOT reorder any sum before this mask.
            lane = jax.lax.broadcasted_iota(jnp.int32, r.shape, 1)
            valid = (gi * tile_f + lane) < f_per_row
            r = jnp.where(valid, r, 0.0)
            l = jnp.where(valid, l, 0.0)
        # Lane-aligned partial sums only (VPU); cross-lane reduce is deferred
        # to the O(N) JAX epilogue.
        inter_ref[...] += _lane_fold(r * l, target)[None]
        denom_ref[...] += _lane_fold(r + l, target)[None]

    ragged = (f_per_row % tile_f) != 0
    has_overhang = (num_splits * tiles_per_split) > total_tiles

    if ragged:
        # Only the single last global tile pays for the mask; overhang tiles
        # (gi >= total_tiles, odd split) fall through and accumulate nothing.
        @pl.when(gi < total_tiles - 1)
        def _():
            accumulate(False)

        @pl.when(gi == total_tiles - 1)
        def _():
            accumulate(True)
    elif has_overhang:
        @pl.when(gi < total_tiles)
        def _():
            accumulate(False)
    else:
        accumulate(False)


# ----------------------------------------------------------------------------
# Wrapper
# ----------------------------------------------------------------------------
def dice_loss(result, label, *, tile_f=None):
    """Pallas implementation of Diceloss.forward.

    result, label: same shape, first dim is batch (e.g. NCHW logits / masks).
    Returns a float32 scalar.
    """
    num = result.shape[0]
    f = 1
    for d in result.shape[1:]:
        f *= d

    g = _pick_row_pack(num, f)
    rows = num * g
    f_per_row = f // g

    # Row-major reshape only (no cast, no pad) — identical element order to
    # torch's .view(num, -1); sample i owns rows [i*g, (i+1)*g).
    rflat = result.reshape(rows, f_per_row)
    lflat = label.reshape(rows, f_per_row)

    # --- generation-aware VMEM sizing ------------------------------------
    kind = _device_kind()
    vmem_cap = _vmem_capacity_bytes(kind)
    num_tcs = _num_tensorcores(kind)
    input_budget = vmem_cap // 2                       # double-buffered inputs
    vmem_limit = int(min(vmem_cap - 8 * _MIB, input_budget + 16 * _MIB))

    # Bytes per lane-column of the *double-buffered* input tiles, with rows
    # rounded up to the sublane tile so the estimate matches the real
    # (8,128)-style VMEM allocation.
    per_lane_bytes = 2 * (
        _sublane_padded_rows(rows, rflat.dtype) * rflat.dtype.itemsize
        + _sublane_padded_rows(rows, lflat.dtype) * lflat.dtype.itemsize)

    if tile_f is None:
        tile_f = _pick_tile_f(per_lane_bytes, f_per_row, input_budget, num_tcs)
    else:
        _validate_tile_f(tile_f, f_per_row)

    acc_lanes = min(tile_f, 128)
    total_tiles = pl.cdiv(f_per_row, tile_f)

    # Use every TensorCore regardless of tile-count parity; an odd count just
    # leaves one clamped+skipped overhang step on one split.
    num_splits = max(1, min(num_tcs, total_tiles))
    tiles_per_split = pl.cdiv(total_tiles, num_splits)
    grid = (num_splits, tiles_per_split)
    last_block = total_tiles - 1

    if num_splits * tiles_per_split > total_tiles:
        def in_idx(p, k):  # clamp the overhang step's DMA to a valid block
            return (0, jnp.minimum(p * tiles_per_split + k, last_block))
    else:
        def in_idx(p, k):
            return (0, p * tiles_per_split + k)

    in_spec = pl.BlockSpec((rows, tile_f), in_idx)
    out_spec = pl.BlockSpec((1, rows, acc_lanes), lambda p, k: (p, 0, 0))
    out_sds = jax.ShapeDtypeStruct((num_splits, rows, acc_lanes), jnp.float32)

    cost = pl.CostEstimate(
        flops=int(6 * rows * f_per_row),
        transcendentals=int(rows * f_per_row),
        bytes_accessed=int(
            rows * f_per_row * (rflat.dtype.itemsize + lflat.dtype.itemsize)
            + 2 * num_splits * rows * acc_lanes * 4),
    )

    kernel = functools.partial(
        _dice_kernel,
        f_per_row=f_per_row,
        tile_f=tile_f,
        total_tiles=total_tiles,
        tiles_per_split=tiles_per_split,
        num_splits=num_splits,
    )

    inter_parts, denom_parts = pl.pallas_call(
        kernel,
        out_shape=(out_sds, out_sds),
        grid=grid,
        in_specs=[in_spec, in_spec],
        out_specs=(out_spec, out_spec),
        compiler_params=pltpu.CompilerParams(
            dimension_semantics=("parallel", "arbitrary"),
            vmem_limit_bytes=vmem_limit,
        ),
        cost_estimate=cost,
    )(rflat, lflat)

    # Tiny O(N) epilogue in plain JAX: combine splits / packed rows / lanes.
    smooth = 1.0
    inter = jnp.sum(
        inter_parts.reshape(num_splits, num, g, acc_lanes), axis=(0, 2, 3))
    denom = jnp.sum(
        denom_parts.reshape(num_splits, num, g, acc_lanes), axis=(0, 2, 3))
    score = (2.0 * inter + smooth) / (denom + smooth)
    return (1.0 - jnp.sum(score) / num).astype(jnp.float32)


# ----------------------------------------------------------------------------
# Reference + self-test
# ----------------------------------------------------------------------------
def _dice_loss_ref(result, label):
    num = result.shape[0]
    smooth = 1.0
    r = jax.nn.sigmoid(result.astype(jnp.float32)).reshape(num, -1)
    l = label.astype(jnp.float32).reshape(num, -1)
    inter = jnp.sum(r * l, axis=1)
    score = (2.0 * inter + smooth) / (jnp.sum(r, axis=1) + jnp.sum(l, axis=1) + smooth)
    return 1.0 - jnp.sum(score) / num


if __name__ == "__main__":
    key = jax.random.PRNGKey(0)
    k1, k2, k3, k4 = jax.random.split(key, 4)

    # NCHW logits and binary labels, like a segmentation head.
    x = jax.random.normal(k1, (2, 4, 16, 16), dtype=jnp.float32)
    y = (jax.random.uniform(k2, (2, 4, 16, 16)) > 0.5).astype(jnp.float32)

    loss = jax.block_until_ready(dice_loss(x, y))
    ref = jax.block_until_ready(_dice_loss_ref(x, y))
    assert jnp.allclose(loss, ref, rtol=1e-5, atol=1e-5), (loss, ref)

    # Ragged case: per-row F (=150) is not a multiple of the lane tile, which
    # exercises the gated in-kernel tail mask, the multi-tile reduction and
    # (on multi-TensorCore chips) the parallel split with overhang handling.
    x2 = jax.random.normal(k3, (2, 3, 20, 20), dtype=jnp.float32)
    y2 = (jax.random.uniform(k4, (2, 3, 20, 20)) > 0.5).astype(jnp.float32)
    loss2 = jax.block_until_ready(dice_loss(x2, y2, tile_f=128))
    ref2 = jax.block_until_ready(_dice_loss_ref(x2, y2))
    assert jnp.allclose(loss2, ref2, rtol=1e-5, atol=1e-5), (loss2, ref2)

    print("KERNEL_OK")
</pallas_src>

<mosaic_0001>
module attributes {stable_mosaic.version = 11 : i64} {
  func.func @_dice_kernel(%arg0: i32, %arg1: i32, %arg2: memref<16x128xf32, #tpu.memory_space<vmem>>, %arg3: memref<16x128xf32, #tpu.memory_space<vmem>>, %arg4: memref<1x16x128xf32, #tpu.memory_space<vmem>>, %arg5: memref<1x16x128xf32, #tpu.memory_space<vmem>>) attributes {dimension_semantics = [#tpu.dimension_semantics<parallel>, #tpu.dimension_semantics<arbitrary>], iteration_bounds = array<i64: 1, 1>, scalar_prefetch = 0 : i64, scratch_operands = 0 : i64, tpu.core_type = #tpu.core_type<tc>, window_params = [{transform_indices = @transform_0, window_bounds = array<i64: 16, 128>}, {transform_indices = @transform_1, window_bounds = array<i64: 16, 128>}, {transform_indices = @transform_2, window_bounds = array<i64: 1, 16, 128>}, {transform_indices = @transform_3, window_bounds = array<i64: 1, 16, 128>}]} {
    %c0_i32 = arith.constant 0 : i32
    %0 = arith.cmpi eq, %arg1, %c0_i32 : i32
    %1 = arith.extui %0 : i1 to i32
    %c0_i32_0 = arith.constant 0 : i32
    %2 = arith.cmpi ne, %1, %c0_i32_0 : i32
    scf.if %2 {
      %cst_16 = arith.constant 0.000000e+00 : f32
      %20 = vector.broadcast %cst_16 : f32 to vector<1x16x128xf32>
      %c0_17 = arith.constant 0 : index
      %c0_18 = arith.constant 0 : index
      %c0_19 = arith.constant 0 : index
      %21 = vector.load %arg4[%c0_17, %c0_18, %c0_19] : memref<1x16x128xf32, #tpu.memory_space<vmem>>, vector<1x16x128xf32>
      tpu.vector_store %arg4[%c0_17, %c0_18, %c0_19], %20 {strides = array<i32>} : memref<1x16x128xf32, #tpu.memory_space<vmem>>, vector<1x16x128xf32>,
      %cst_20 = arith.constant 0.000000e+00 : f32
      %22 = vector.broadcast %cst_20 : f32 to vector<1x16x128xf32>
      %c0_21 = arith.constant 0 : index
      %c0_22 = arith.constant 0 : index
      %c0_23 = arith.constant 0 : index
      %23 = vector.load %arg5[%c0_21, %c0_22, %c0_23] : memref<1x16x128xf32, #tpu.memory_space<vmem>>, vector<1x16x128xf32>
      tpu.vector_store %arg5[%c0_21, %c0_22, %c0_23], %22 {strides = array<i32>} : memref<1x16x128xf32, #tpu.memory_space<vmem>>, vector<1x16x128xf32>,
    } else {
    }
    %c0 = arith.constant 0 : index
    %c0_1 = arith.constant 0 : index
    %3 = vector.load %arg2[%c0, %c0_1] : memref<16x128xf32, #tpu.memory_space<vmem>>, vector<16x128xf32>
    %4 = arith.negf %3 : vector<16x128xf32>
    %5 = math.exp %4 : vector<16x128xf32>
    %cst = arith.constant 1.000000e+00 : f32
    %6 = vector.broadcast %cst : f32 to vector<16x128xf32>
    %7 = arith.addf %6, %5 : vector<16x128xf32>
    %8 = arith.divf %6, %7 : vector<16x128xf32>
    %c0_2 = arith.constant 0 : index
    %c0_3 = arith.constant 0 : index
    %9 = vector.load %arg3[%c0_2, %c0_3] : memref<16x128xf32, #tpu.memory_space<vmem>>, vector<16x128xf32>
    %c0_4 = arith.constant 0 : index
    %c0_5 = arith.constant 0 : index
    %c0_6 = arith.constant 0 : index
    %10 = vector.load %arg4[%c0_4, %c0_5, %c0_6] : memref<1x16x128xf32, #tpu.memory_space<vmem>>, vector<1x16x128xf32>
    %11 = arith.mulf %8, %9 : vector<16x128xf32>
    %12 = vector.shape_cast %11 : vector<16x128xf32> to vector<1x16x128xf32>
    %13 = arith.addf %10, %12 : vector<1x16x128xf32>
    %c0_7 = arith.constant 0 : index
    %c0_8 = arith.constant 0 : index
    %c0_9 = arith.constant 0 : index
    %14 = vector.load %arg4[%c0_7, %c0_8, %c0_9] : memref<1x16x128xf32, #tpu.memory_space<vmem>>, vector<1x16x128xf32>
    tpu.vector_store %arg4[%c0_7, %c0_8, %c0_9], %13 {strides = array<i32>} : memref<1x16x128xf32, #tpu.memory_space<vmem>>, vector<1x16x128xf32>,
    %c0_10 = arith.constant 0 : index
    %c0_11 = arith.constant 0 : index
    %c0_12 = arith.constant 0 : index
    %15 = vector.load %arg5[%c0_10, %c0_11, %c0_12] : memref<1x16x128xf32, #tpu.memory_space<vmem>>, vector<1x16x128xf32>
    %16 = arith.addf %8, %9 : vector<16x128xf32>
    %17 = vector.shape_cast %16 : vector<16x128xf32> to vector<1x16x128xf32>
    %18 = arith.addf %15, %17 : vector<1x16x128xf32>
    %c0_13 = arith.constant 0 : index
    %c0_14 = arith.constant 0 : index
    %c0_15 = arith.constant 0 : index
    %19 = vector.load %arg5[%c0_13, %c0_14, %c0_15] : memref<1x16x128xf32, #tpu.memory_space<vmem>>, vector<1x16x128xf32>
    tpu.vector_store %arg5[%c0_13, %c0_14, %c0_15], %18 {strides = array<i32>} : memref<1x16x128xf32, #tpu.memory_space<vmem>>, vector<1x16x128xf32>,
    return
  }
  func.func @transform_0(%arg0: i32, %arg1: i32) -> (i32, i32) {
    %c1_i32 = arith.constant 1 : i32
    %0 = arith.muli %arg0, %c1_i32 : i32
    %1 = arith.addi %0, %arg1 : i32
    %c0_i32 = arith.constant 0 : i32
    %c0_i32_0 = arith.constant 0 : i32
    return %c0_i32, %1 : i32, i32
  }
  func.func @transform_1(%arg0: i32, %arg1: i32) -> (i32, i32) {
    %c1_i32 = arith.constant 1 : i32
    %0 = arith.muli %arg0, %c1_i32 : i32
    %1 = arith.addi %0, %arg1 : i32
    %c0_i32 = arith.constant 0 : i32
    %c0_i32_0 = arith.constant 0 : i32
    return %c0_i32, %1 : i32, i32
  }
  func.func @transform_2(%arg0: i32, %arg1: i32) -> (i32, i32, i32) {
    %c0_i32 = arith.constant 0 : i32
    %c0_i32_0 = arith.constant 0 : i32
    %c0_i32_1 = arith.constant 0 : i32
    return %arg0, %c0_i32, %c0_i32_0 : i32, i32, i32
  }
  func.func @transform_3(%arg0: i32, %arg1: i32) -> (i32, i32, i32) {
    %c0_i32 = arith.constant 0 : i32
    %c0_i32_0 = arith.constant 0 : i32
    %c0_i32_1 = arith.constant 0 : i32
    return %arg0, %c0_i32, %c0_i32_0 : i32, i32, i32
  }
}

</mosaic_0001>

<llo_original>
// kernel: tpu_custom_call.1
$region0: #{tpu_custom_call.1}
  #allocation0 [shape = 'u32[]', space=smem, size = 0x4, offset = 0x4, fixed_abs, tag = 'smem constant byte address 0x4 - core index']
  #allocation1 [shape = 'u32[144,128]{1,0:T(1,128)}', space=vmem, size = 0x12000, scoped, tag = 'internal scratch']
  %s0 = inlined_call_operand.hbm [shape: f32[16,128], index: 0, kind: input, shape index: {}]
  %s1 = inlined_call_operand.hbm [shape: f32[16,128], index: 1, kind: input, shape index: {}]
  %s2 = inlined_call_operand.hbm [shape: f32[1,16,128], index: 2, kind: output, shape index: {0}]
  %s3 = inlined_call_operand.hbm [shape: f32[1,16,128], index: 3, kind: output, shape index: {1}]
  %4 = xla_tuple %s2, %s3
  %s5 = sld [smem:[#allocation0]]
  $region38: #{tpu_custom_call.1} parent=0
    _
  %s7 = ssub.s32 1, %s5
  %s8 = scalar_select 0, %s7, %s5
  $region1: #{tpu_custom_call.1} parent=0
    #allocation2 [shape = 'u8[8192]{0}', space=vmem, size = 0x2000, scoped, tag = 'input window, operand 0, single buffered']
    #allocation3 [shape = 's32[1]{0}', space=sflag, size = 0x4, scoped, tag = 'scoped memory for tpu_custom_call.1']
    #allocation4 [shape = 's32[1]{0}', space=sflag, size = 0x4, scoped, tag = 'scoped memory for tpu_custom_call.1']
    #allocation5 [shape = 'u8[8192]{0}', space=vmem, size = 0x2000, scoped, tag = 'input window, operand 1, single buffered']
    #allocation6 [shape = 's32[1]{0}', space=sflag, size = 0x4, scoped, tag = 'scoped memory for tpu_custom_call.1']
    #allocation7 [shape = 'u8[8192]{0}', space=vmem, size = 0x2000, scoped, tag = 'output window, operand 0, single buffered']
    #allocation8 [shape = 'u8[8192]{0}', space=vmem, size = 0x2000, scoped, tag = 'output window, operand 1, single buffered']
    #allocation9 [shape = 's32[1]{0}', space=sflag, size = 0x4, scoped, tag = 'scoped memory for tpu_custom_call.1']
    %9 = vsyncpa [#allocation3], 0
    %10 = vsyncpa [#allocation6], 0
    %11 = vsyncpa [#allocation4], 0
    %12 = vsyncpa [#allocation9], 0
    // Predicated region
    $region2: #{tpu_custom_call.1} parent=1 // pred_check
      _
    $region3: #{tpu_custom_call.1} parent=1 // pred_check_branch
      %14 = sbr.rel (0) target = $region5
    $region4: #{tpu_custom_call.1} parent=1 // pred_region
      %s15 = sadd.s32 0, 0
      %s17 = ssub.s32 256, 256
      %18 = vsyncadd [#allocation3], %s17
      %s19 = smul.addr %s15, 128
      %s20 = scalar_lea.hbm %s0, %s19
      %s21 = sshll.u32 [#allocation2], 4
      %s22 = int_to_ptr.vmem [resolvable:$true] %s21
      %27 = dma.hbm_to_vmem [thread:$0]  %s20, 256, %s22, [#allocation3], 128, 128, 8
    $region5: #{tpu_custom_call.1} parent=1 // pred_fallthru
      _
    // Predicated region
    $region6: #{tpu_custom_call.1} parent=1 // pred_check
      _
    $region7: #{tpu_custom_call.1} parent=1 // pred_check_branch
      %29 = sbr.rel (0) target = $region9
    $region8: #{tpu_custom_call.1} parent=1 // pred_region
      %s30 = sadd.s32 0, 0
      %s32 = ssub.s32 256, 256
      %33 = vsyncadd [#allocation6], %s32
      %s34 = smul.addr %s30, 128
      %s35 = scalar_lea.hbm %s1, %s34
      %s36 = sshll.u32 [#allocation5], 4
      %s37 = int_to_ptr.vmem [resolvable:$true] %s36
      %42 = dma.hbm_to_vmem [thread:$0]  %s35, 256, %s37, [#allocation6], 128, 128, 8
    $region9: #{tpu_custom_call.1} parent=1 // pred_fallthru
      _
    // Predicated region
    $region10: #{tpu_custom_call.1} parent=1 // pred_check
      _
    $region11: #{tpu_custom_call.1} parent=1 // pred_check_branch
      %44 = sbr.rel (0) target = $region13
    $region12: #{tpu_custom_call.1} parent=1 // pred_region
      %45 = dma.done [#allocation3], 256
    $region13: #{tpu_custom_call.1} parent=1 // pred_fallthru
      _
    // Predicated region
    $region14: #{tpu_custom_call.1} parent=1 // pred_check
      _
    $region15: #{tpu_custom_call.1} parent=1 // pred_check_branch
      %47 = sbr.rel (0) target = $region17
    $region16: #{tpu_custom_call.1} parent=1 // pred_region
      %48 = dma.done [#allocation6], 256
    $region17: #{tpu_custom_call.1} parent=1 // pred_fallthru
      _
    %s49 = sadd.s32 0, 0
    %s50 = sadd.s32 0, 0
    %p51 = scmp.eq.s32.totalorder 0, 0
    // Predicated region
    $region18: #{tpu_custom_call.1} parent=1 // pred_check
      %p52 = pneg %p51
    $region19: #{tpu_custom_call.1} parent=1 // pred_check_branch
      %54 = sbr.rel (%p52) target = $region21
    $region20: #{tpu_custom_call.1} parent=1 // pred_region
      %55 = vst [vmem:[#allocation7] sm:$0xff] 0.0
      %56 = vst [vmem:[#allocation7 + $0x8] sm:$0xff] 0.0
      %57 = vst [vmem:[#allocation8] sm:$0xff] 0.0
      %58 = vst [vmem:[#allocation8 + $0x8] sm:$0xff] 0.0
    $region21: #{tpu_custom_call.1} parent=1 // pred_fallthru
      _
    %v59 = vld [vmem:[#allocation2] sm:$0xff]
    %v60 = vld [vmem:[#allocation2 + $0x8] sm:$0xff]
    %v61 = vxor.u32 %v59, 2147483648
    %v62 = vxor.u32 %v60, 2147483648
    %v63 = vmul.f32 %v61, 1.442695
    %v64 = vpow.pop %v63
    %v65 = vmul.f32 %v62, 1.442695
    %v66 = vpow.pop %v65
    %v67 = vadd.f32 %v64, 1.0
    %v68 = vadd.f32 %v66, 1.0
    %v69 = vrcp.pop %v67
    %v70 = vmul.f32 1.0, %v69
    %v71 = vrcp.pop %v68
    %v72 = vmul.f32 1.0, %v71
    %v73 = vld [vmem:[#allocation5] sm:$0xff]
    %v74 = vld [vmem:[#allocation5 + $0x8] sm:$0xff]
    %v75 = vld [vmem:[#allocation7] sm:$0xff]
    %v76 = vld [vmem:[#allocation7 + $0x8] sm:$0xff]
    %v77 = vmul.f32 %v70, %v73
    %v78 = vmul.f32 %v72, %v74
    %v79 = vadd.f32 %v75, %v77
    %v80 = vadd.f32 %v76, %v78
    %81 = vst [vmem:[#allocation7] sm:$0xff] %v79
    %82 = vst [vmem:[#allocation7 + $0x8] sm:$0xff] %v80
    %v83 = vld [vmem:[#allocation8] sm:$0xff]
    %v84 = vld [vmem:[#allocation8 + $0x8] sm:$0xff]
    %v85 = vadd.f32 %v70, %v73
    %v86 = vadd.f32 %v72, %v74
    %v87 = vadd.f32 %v83, %v85
    %v88 = vadd.f32 %v84, %v86
    %89 = vst [vmem:[#allocation8] sm:$0xff] %v87
    %90 = vst [vmem:[#allocation8 + $0x8] sm:$0xff] %v88
    // Predicated region
    $region22: #{tpu_custom_call.1} parent=1 // pred_check
      _
    $region23: #{tpu_custom_call.1} parent=1 // pred_check_branch
      %92 = sbr.rel (0) target = $region25
    $region24: #{tpu_custom_call.1} parent=1 // pred_region
      %s94 = ssub.s32 256, 256
      %95 = vsyncadd [#allocation4], %s94
      %s96 = sshll.u32 [#allocation7], 4
      %s97 = int_to_ptr.vmem [resolvable:$true] %s96
      %102 = dma.vmem_to_hbm [thread:$0]  %s97, 256, %s2, [#allocation4], 128, 128, 8
    $region25: #{tpu_custom_call.1} parent=1 // pred_fallthru
      _
    // Predicated region
    $region26: #{tpu_custom_call.1} parent=1 // pred_check
      _
    $region27: #{tpu_custom_call.1} parent=1 // pred_check_branch
      %104 = sbr.rel (0) target = $region29
    $region28: #{tpu_custom_call.1} parent=1 // pred_region
      %s106 = ssub.s32 256, 256
      %107 = vsyncadd [#allocation9], %s106
      %s108 = sshll.u32 [#allocation8], 4
      %s109 = int_to_ptr.vmem [resolvable:$true] %s108
      %114 = dma.vmem_to_hbm [thread:$0]  %s109, 256, %s3, [#allocation9], 128, 128, 8
    $region29: #{tpu_custom_call.1} parent=1 // pred_fallthru
      _
    // Predicated region
    $region30: #{tpu_custom_call.1} parent=1 // pred_check
      _
    $region31: #{tpu_custom_call.1} parent=1 // pred_check_branch
      %116 = sbr.rel (0) target = $region33
    $region32: #{tpu_custom_call.1} parent=1 // pred_region
      %117 = dma.done [#allocation4], 256
    $region33: #{tpu_custom_call.1} parent=1 // pred_fallthru
      _
    // Predicated region
    $region34: #{tpu_custom_call.1} parent=1 // pred_check
      _
    $region35: #{tpu_custom_call.1} parent=1 // pred_check_branch
      %119 = sbr.rel (0) target = $region37
    $region36: #{tpu_custom_call.1} parent=1 // pred_region
      %120 = dma.done [#allocation9], 256
    $region37: #{tpu_custom_call.1} parent=1 // pred_fallthru
      _
    %121 = vsyncpa [#allocation3], 1
    %122 = vsyncpa [#allocation6], 1
    %123 = vsyncpa [#allocation4], 1
    %124 = vsyncpa [#allocation9], 1

</llo_original>
